<compile_context>
chip_gen: v7x
topology: tpu7x:2x2x1
jax: 0.10.0
libtpu: 0.0.40
codegen_flags: <defaults>
</compile_context>

<pallas_src>
import jax
import jax.numpy as jnp
from jax.experimental import pallas as pl
from jax.experimental.pallas import tpu as pltpu


def gru_fused_kernel(tok_ref, emb_ref, h0_ref, wx_ref, wh_ref, bx_ref, bh_ref, out_ref):
    # tok_ref : SMEM (T,)  int32  -- scalar-prefetched token indices
    # emb_ref : VMEM (V, H)       -- whole embedding table, resident
    # h0_ref  : VMEM (1, H)       -- initial hidden state
    # wx_ref  : VMEM (H, 3H)      -- W_ih.T, gate columns [r | z | n]
    # wh_ref  : VMEM (H, 3H)      -- W_hh.T, gate columns [r | z | n]
    # bx_ref  : VMEM (1, 3H) f32  -- b_ih
    # bh_ref  : VMEM (1, 3H) f32  -- b_hh
    # out_ref : VMEM (T, H)  f32  -- per-step GRU outputs (row t = hidden after step t)
    H = h0_ref.shape[-1]
    T = out_ref.shape[0]

    # Hoist resident operand loads out of the recurrence loop.
    wx = wx_ref[...]
    wh = wh_ref[...]
    bx = bx_ref[...]
    bh = bh_ref[...]

    def step(t, h):
        tok = tok_ref[t]                              # scalar read from SMEM
        x = emb_ref[pl.ds(tok, 1), :]                 # in-VMEM embedding row gather, (1, H)
        # Two MXU matmuls (no concat, no zero-padded weight blocks), f32 accumulation.
        gx = jnp.dot(x, wx, preferred_element_type=jnp.float32) + bx          # (1, 3H)
        gh = jnp.dot(h.astype(wh.dtype), wh, preferred_element_type=jnp.float32) + bh
        rz = jax.nn.sigmoid(gx[:, :2 * H] + gh[:, :2 * H])                    # r|z in one EUP pass
        r = rz[:, :H]
        z = rz[:, H:]
        n = jnp.tanh(gx[:, 2 * H:] + r * gh[:, 2 * H:])                       # PyTorch n-gate exact
        h_new = (1.0 - z) * n + z * h                                         # gating stays f32
        out_ref[pl.ds(t, 1), :] = h_new.astype(out_ref.dtype)                 # VMEM row store
        return h_new

    h0 = h0_ref[...].astype(jnp.float32)
    # T is small & static here -> fully unrolled for LLO scheduling visibility.
    # TODO(synk): for very large T, switch to a chunked grid with a VMEM hidden-state scratch.
    jax.lax.fori_loop(0, T, step, h0, unroll=True)


def pack_gru_params(w_ih, w_hh, b_ih, b_hh, dtype=jnp.float32):
    """Pack PyTorch single-layer GRU weights (gate order [r, z, n]) once, outside any step loop.

    Returns:
      wx (H, 3H) = W_ih.T, wh (H, 3H) = W_hh.T  (cast to `dtype`; use bf16 on v6e/v7x),
      bx (1, 3H) = b_ih,   bh (1, 3H) = b_hh    (always f32; added post-accumulation).
    """
    H = w_ih.shape[1]
    wx = jnp.asarray(w_ih).T.astype(dtype)                 # (H, 3H), columns [r | z | n]
    wh = jnp.asarray(w_hh).T.astype(dtype)                 # (H, 3H)
    bx = jnp.asarray(b_ih).reshape(1, 3 * H).astype(jnp.float32)
    bh = jnp.asarray(b_hh).reshape(1, 3 * H).astype(jnp.float32)
    return wx, wh, bx, bh


def encoder_rnn_forward(tokens, hidden, embedding, wx, wh, bx, bh):
    """tokens: int32 (T,); hidden: (1, 1, H); embedding: (V, H).
    Returns (output (T, 1, H) f32, hidden (1, 1, H) f32).  T=1 reproduces EncoderRNN.forward."""
    T = int(tokens.shape[0])
    V, H = embedding.shape
    h0 = hidden.reshape(1, H).astype(jnp.float32)

    out = pl.pallas_call(
        gru_fused_kernel,
        out_shape=jax.ShapeDtypeStruct((T, H), jnp.float32),
        grid_spec=pltpu.PrefetchScalarGridSpec(
            num_scalar_prefetch=1,                  # token indices -> SMEM
            grid=(1,),                              # whole recurrence in ONE grid step
            in_specs=[
                pl.BlockSpec((V, H), lambda i, tok: (0, 0)),          # embedding table, resident
                pl.BlockSpec((1, H), lambda i, tok: (0, 0)),          # initial hidden
                pl.BlockSpec((H, 3 * H), lambda i, tok: (0, 0)),      # W_ih.T
                pl.BlockSpec((H, 3 * H), lambda i, tok: (0, 0)),      # W_hh.T
                pl.BlockSpec((1, 3 * H), lambda i, tok: (0, 0)),      # b_ih
                pl.BlockSpec((1, 3 * H), lambda i, tok: (0, 0)),      # b_hh
            ],
            out_specs=pl.BlockSpec((T, H), lambda i, tok: (0, 0)),    # single slab writeback
        ),
        compiler_params=pltpu.CompilerParams(
            dimension_semantics=("arbitrary",),
        ),
    )(tokens.astype(jnp.int32), embedding, h0, wx, wh, bx, bh)

    output = out.reshape(T, 1, H)
    hidden_out = out[T - 1].reshape(1, 1, H)     # final hidden == last GRU output row
    return output, hidden_out


if __name__ == "__main__":
    V, H = 16, 32   # input_size (vocab) = 16, hidden_size = 32

    key = jax.random.PRNGKey(0)
    k_emb, k_wih, k_whh, k_bih, k_bhh, k_tok = jax.random.split(key, 6)

    # Deterministic synthetic parameters (shapes match nn.Embedding / single-layer nn.GRU).
    embedding = jax.random.normal(k_emb, (V, H), jnp.float32)
    bound = 1.0 / jnp.sqrt(H)
    w_ih = jax.random.uniform(k_wih, (3 * H, H), jnp.float32, -bound, bound)
    w_hh = jax.random.uniform(k_whh, (3 * H, H), jnp.float32, -bound, bound)
    b_ih = jax.random.uniform(k_bih, (3 * H,), jnp.float32, -bound, bound)
    b_hh = jax.random.uniform(k_bhh, (3 * H,), jnp.float32, -bound, bound)

    # Pack ONCE, outside any per-step call.
    wx, wh, bx, bh = pack_gru_params(w_ih, w_hh, b_ih, b_hh)

    # Pure-JAX reference of one PyTorch GRU step (gate order r, z, n).
    def gru_ref_step(x, h):
        gi = x @ w_ih.T + b_ih
        gh = h @ w_hh.T + b_hh
        r = jax.nn.sigmoid(gi[:, :H] + gh[:, :H])
        z = jax.nn.sigmoid(gi[:, H:2 * H] + gh[:, H:2 * H])
        n = jnp.tanh(gi[:, 2 * H:] + r * gh[:, 2 * H:])
        return (1.0 - z) * n + z * h

    # --- Module semantics: single token, seq_len = 1, batch = 1 ---
    token = jnp.array([5], dtype=jnp.int32)          # `input`
    hidden0 = jnp.zeros((1, 1, H), jnp.float32)      # initHidden()
    output, hidden = encoder_rnn_forward(token, hidden0, embedding, wx, wh, bx, bh)
    jax.block_until_ready((output, hidden))

    h_expected = gru_ref_step(embedding[token[0]][None, :], hidden0.reshape(1, H))
    assert output.shape == (1, 1, H) and hidden.shape == (1, 1, H)
    assert jnp.allclose(output.reshape(1, H), h_expected, atol=1e-5)
    assert jnp.allclose(hidden.reshape(1, H), h_expected, atol=1e-5)

    # --- Fused multi-step path: whole sequence in one grid step, weights resident ---
    T = 6
    tokens = jax.random.randint(k_tok, (T,), 0, V, dtype=jnp.int32)
    outs, hid_T = encoder_rnn_forward(tokens, hidden0, embedding, wx, wh, bx, bh)
    jax.block_until_ready((outs, hid_T))

    h_ref = hidden0.reshape(1, H)
    outs_ref = []
    for t in range(T):
        h_ref = gru_ref_step(embedding[tokens[t]][None, :], h_ref)
        outs_ref.append(h_ref)
    outs_ref = jnp.concatenate(outs_ref, axis=0)
    assert outs.shape == (T, 1, H)
    assert jnp.allclose(outs.reshape(T, H), outs_ref, atol=1e-5)
    assert jnp.allclose(hid_T.reshape(1, H), h_ref, atol=1e-5)

    # --- bf16 weights/embedding (v6e/v7x path): f32 MXU accumulation, f32 gating ---
    wx16, wh16, bx16, bh16 = pack_gru_params(w_ih, w_hh, b_ih, b_hh, dtype=jnp.bfloat16)
    outs16, hid16 = encoder_rnn_forward(tokens, hidden0,
                                        embedding.astype(jnp.bfloat16),
                                        wx16, wh16, bx16, bh16)
    jax.block_until_ready((outs16, hid16))
    assert jnp.allclose(outs16.reshape(T, H), outs_ref, atol=5e-2)
    assert jnp.allclose(hid16.reshape(1, H), h_ref, atol=5e-2)

    print("KERNEL_OK")
</pallas_src>

<mosaic_0001>
module attributes {stable_mosaic.version = 11 : i64} {
  func.func @gru_fused_kernel(%arg0: i32, %arg1: memref<1xi32, #tpu.memory_space<smem>>, %arg2: memref<16x32xf32, #tpu.memory_space<vmem>>, %arg3: memref<1x32xf32, #tpu.memory_space<vmem>>, %arg4: memref<32x96xf32, #tpu.memory_space<vmem>>, %arg5: memref<32x96xf32, #tpu.memory_space<vmem>>, %arg6: memref<1x96xf32, #tpu.memory_space<vmem>>, %arg7: memref<1x96xf32, #tpu.memory_space<vmem>>, %arg8: memref<1x32xf32, #tpu.memory_space<vmem>>) attributes {dimension_semantics = [#tpu.dimension_semantics<arbitrary>], iteration_bounds = array<i64: 1>, scalar_prefetch = 1 : i64, scratch_operands = 0 : i64, tpu.core_type = #tpu.core_type<tc>, window_params = [{pipeline_mode = #tpu.pipeline_mode<synchronous>, transform_indices = @transform_0, window_bounds = array<i64: 16, 32>}, {pipeline_mode = #tpu.pipeline_mode<synchronous>, transform_indices = @transform_1, window_bounds = array<i64: 1, 32>}, {pipeline_mode = #tpu.pipeline_mode<synchronous>, transform_indices = @transform_2, window_bounds = array<i64: 32, 96>}, {pipeline_mode = #tpu.pipeline_mode<synchronous>, transform_indices = @transform_3, window_bounds = array<i64: 32, 96>}, {pipeline_mode = #tpu.pipeline_mode<synchronous>, transform_indices = @transform_4, window_bounds = array<i64: 1, 96>}, {pipeline_mode = #tpu.pipeline_mode<synchronous>, transform_indices = @transform_5, window_bounds = array<i64: 1, 96>}, {pipeline_mode = #tpu.pipeline_mode<synchronous>, transform_indices = @transform_6, window_bounds = array<i64: 1, 32>}]} {
    %c0 = arith.constant 0 : index
    %c0_0 = arith.constant 0 : index
    %0 = vector.load %arg4[%c0, %c0_0] : memref<32x96xf32, #tpu.memory_space<vmem>>, vector<32x96xf32>
    %c0_1 = arith.constant 0 : index
    %c0_2 = arith.constant 0 : index
    %1 = vector.load %arg5[%c0_1, %c0_2] : memref<32x96xf32, #tpu.memory_space<vmem>>, vector<32x96xf32>
    %c0_3 = arith.constant 0 : index
    %c0_4 = arith.constant 0 : index
    %2 = vector.load %arg6[%c0_3, %c0_4] : memref<1x96xf32, #tpu.memory_space<vmem>>, vector<1x96xf32>
    %c0_5 = arith.constant 0 : index
    %c0_6 = arith.constant 0 : index
    %3 = vector.load %arg7[%c0_5, %c0_6] : memref<1x96xf32, #tpu.memory_space<vmem>>, vector<1x96xf32>
    %c0_7 = arith.constant 0 : index
    %c0_8 = arith.constant 0 : index
    %4 = vector.load %arg3[%c0_7, %c0_8] : memref<1x32xf32, #tpu.memory_space<vmem>>, vector<1x32xf32>
    %c0_i32 = arith.constant 0 : i32
    %5 = arith.index_cast %c0_i32 : i32 to index
    %6 = memref.load %arg1[%5] : memref<1xi32, #tpu.memory_space<smem>>
    %7 = arith.index_cast %6 : i32 to index
    %c0_9 = arith.constant 0 : index
    %8 = vector.load %arg2[%7, %c0_9] : memref<16x32xf32, #tpu.memory_space<vmem>>, vector<1x32xf32>
    %cst = arith.constant dense<0.000000e+00> : vector<1x96xf32>
    %9 = tpu.matmul %8, %0, %cst {dimension_numbers = #tpu.dot_dimension_numbers<[1], [0], [0], [1], [0, 0, 1, 1], [], []>} : vector<1x32xf32>, vector<32x96xf32>, vector<1x96xf32> -> vector<1x96xf32>
    %10 = arith.addf %9, %2 : vector<1x96xf32>
    %cst_10 = arith.constant dense<0.000000e+00> : vector<1x96xf32>
    %11 = tpu.matmul %4, %1, %cst_10 {dimension_numbers = #tpu.dot_dimension_numbers<[1], [0], [0], [1], [0, 0, 1, 1], [], []>} : vector<1x32xf32>, vector<32x96xf32>, vector<1x96xf32> -> vector<1x96xf32>
    %12 = arith.addf %11, %3 : vector<1x96xf32>
    %13 = vector.extract_strided_slice %10 {offsets = [0, 0], sizes = [1, 64], strides = [1, 1]} : vector<1x96xf32> to vector<1x64xf32>
    %14 = vector.extract_strided_slice %12 {offsets = [0, 0], sizes = [1, 64], strides = [1, 1]} : vector<1x96xf32> to vector<1x64xf32>
    %15 = arith.addf %13, %14 : vector<1x64xf32>
    %16 = arith.negf %15 : vector<1x64xf32>
    %17 = math.exp %16 : vector<1x64xf32>
    %cst_11 = arith.constant 1.000000e+00 : f32
    %18 = vector.broadcast %cst_11 : f32 to vector<1x64xf32>
    %19 = arith.addf %18, %17 : vector<1x64xf32>
    %20 = arith.divf %18, %19 : vector<1x64xf32>
    %21 = vector.extract_strided_slice %20 {offsets = [0, 0], sizes = [1, 32], strides = [1, 1]} : vector<1x64xf32> to vector<1x32xf32>
    %22 = vector.extract_strided_slice %20 {offsets = [0, 32], sizes = [1, 32], strides = [1, 1]} : vector<1x64xf32> to vector<1x32xf32>
    %23 = vector.extract_strided_slice %10 {offsets = [0, 64], sizes = [1, 32], strides = [1, 1]} : vector<1x96xf32> to vector<1x32xf32>
    %24 = vector.extract_strided_slice %12 {offsets = [0, 64], sizes = [1, 32], strides = [1, 1]} : vector<1x96xf32> to vector<1x32xf32>
    %25 = arith.mulf %21, %24 : vector<1x32xf32>
    %26 = arith.addf %23, %25 : vector<1x32xf32>
    %27 = math.tanh %26 : vector<1x32xf32>
    %cst_12 = arith.constant 1.000000e+00 : f32
    %28 = vector.broadcast %cst_12 : f32 to vector<1x32xf32>
    %29 = arith.subf %28, %22 : vector<1x32xf32>
    %30 = arith.mulf %29, %27 : vector<1x32xf32>
    %31 = arith.mulf %22, %4 : vector<1x32xf32>
    %32 = arith.addf %30, %31 : vector<1x32xf32>
    %33 = arith.index_cast %c0_i32 : i32 to index
    %c0_13 = arith.constant 0 : index
    %34 = vector.load %arg8[%33, %c0_13] : memref<1x32xf32, #tpu.memory_space<vmem>>, vector<1x32xf32>
    tpu.vector_store %arg8[%33, %c0_13], %32 {strides = array<i32>} : memref<1x32xf32, #tpu.memory_space<vmem>>, vector<1x32xf32>,
    %c1_i32 = arith.constant 1 : i32
    return
  }
  func.func @transform_0(%arg0: i32, %arg1: memref<1xi32, #tpu.memory_space<smem>>) -> (i32, i32) {
    %c0_i32 = arith.constant 0 : i32
    %c0_i32_0 = arith.constant 0 : i32
    %c0_i32_1 = arith.constant 0 : i32
    return %c0_i32, %c0_i32_0 : i32, i32
  }
  func.func @transform_1(%arg0: i32, %arg1: memref<1xi32, #tpu.memory_space<smem>>) -> (i32, i32) {
    %c0_i32 = arith.constant 0 : i32
    %c0_i32_0 = arith.constant 0 : i32
    %c0_i32_1 = arith.constant 0 : i32
    return %c0_i32, %c0_i32_0 : i32, i32
  }
  func.func @transform_2(%arg0: i32, %arg1: memref<1xi32, #tpu.memory_space<smem>>) -> (i32, i32) {
    %c0_i32 = arith.constant 0 : i32
    %c0_i32_0 = arith.constant 0 : i32
    %c0_i32_1 = arith.constant 0 : i32
    return %c0_i32, %c0_i32_0 : i32, i32
  }
  func.func @transform_3(%arg0: i32, %arg1: memref<1xi32, #tpu.memory_space<smem>>) -> (i32, i32) {
    %c0_i32 = arith.constant 0 : i32
    %c0_i32_0 = arith.constant 0 : i32
    %c0_i32_1 = arith.constant 0 : i32
    return %c0_i32, %c0_i32_0 : i32, i32
  }
  func.func @transform_4(%arg0: i32, %arg1: memref<1xi32, #tpu.memory_space<smem>>) -> (i32, i32) {
    %c0_i32 = arith.constant 0 : i32
    %c0_i32_0 = arith.constant 0 : i32
    %c0_i32_1 = arith.constant 0 : i32
    return %c0_i32, %c0_i32_0 : i32, i32
  }
  func.func @transform_5(%arg0: i32, %arg1: memref<1xi32, #tpu.memory_space<smem>>) -> (i32, i32) {
    %c0_i32 = arith.constant 0 : i32
    %c0_i32_0 = arith.constant 0 : i32
    %c0_i32_1 = arith.constant 0 : i32
    return %c0_i32, %c0_i32_0 : i32, i32
  }
  func.func @transform_6(%arg0: i32, %arg1: memref<1xi32, #tpu.memory_space<smem>>) -> (i32, i32) {
    %c0_i32 = arith.constant 0 : i32
    %c0_i32_0 = arith.constant 0 : i32
    %c0_i32_1 = arith.constant 0 : i32
    return %c0_i32, %c0_i32_0 : i32, i32
  }
}

</mosaic_0001>

<llo_original>
// kernel: tpu_custom_call.1
$region0: #{tpu_custom_call.1}
  #allocation0 [shape = 'u32[]', space=smem, size = 0x4, offset = 0x4, fixed_abs, tag = 'smem constant byte address 0x4 - core index']
  #allocation1 [shape = 'u32[144,128]{1,0:T(1,128)}', space=vmem, size = 0x12000, scoped, tag = 'internal scratch']
  #allocation2 [shape = 's32[1]{0}', space=sflag, size = 0x4, scoped, tag = 'scoped memory for tpu_custom_call.1']
  #allocation3 [shape = 's32[1]{0:T(128)S(6)}', space=smem, size = 0x200, scoped, tag = 'prefetched SMEM operand 0']
  %s0 = inlined_call_operand.<no memory space> [shape: s32[1], index: 0, kind: input, shape index: {}]
  %s1 = inlined_call_operand.hbm [shape: f32[16,32], index: 1, kind: input, shape index: {}]
  %s2 = inlined_call_operand.vmem [shape: f32[1,32], index: 2, kind: input, shape index: {}]
  %s3 = inlined_call_operand.hbm [shape: f32[32,96], index: 3, kind: input, shape index: {}]
  %s4 = inlined_call_operand.hbm [shape: f32[32,96], index: 4, kind: input, shape index: {}]
  %s5 = inlined_call_operand.vmem [shape: f32[1,96], index: 5, kind: input, shape index: {}]
  %s6 = inlined_call_operand.vmem [shape: f32[1,96], index: 6, kind: input, shape index: {}]
  %s7 = inlined_call_operand.hbm [shape: f32[1,32], index: 7, kind: output, shape index: {}]
  %s8 = sld [smem:[#allocation0]]
  $region46: #{tpu_custom_call.1} parent=0
    _
  %s10 = ssub.s32 1, %s8
  %s11 = scalar_select 0, %s10, %s8
  %12 = sst [smem:[#allocation3]] %s0
  $region1: #{tpu_custom_call.1} parent=0
    #allocation4 [shape = 'u8[8192]{0}', space=vmem, size = 0x2000, scoped, tag = 'input window, operand 1, single buffered']
    #allocation5 [shape = 's32[1]{0}', space=sflag, size = 0x4, scoped, tag = 'scoped memory for tpu_custom_call.1']
    #allocation6 [shape = 's32[1]{0}', space=sflag, size = 0x4, scoped, tag = 'scoped memory for tpu_custom_call.1']
    #allocation7 [shape = 'u8[16384]{0}', space=vmem, size = 0x4000, scoped, tag = 'input window, operand 3, single buffered']
    #allocation8 [shape = 's32[1]{0}', space=sflag, size = 0x4, scoped, tag = 'scoped memory for tpu_custom_call.1']
    #allocation9 [shape = 'u8[16384]{0}', space=vmem, size = 0x4000, scoped, tag = 'input window, operand 4, single buffered']
    #allocation10 [shape = 'u8[512]{0}', space=vmem, size = 0x400, scoped, tag = 'output window, operand 0, single buffered']
    %13 = vsyncpa [#allocation5], 0
    %14 = vsyncpa [#allocation8], 0
    %15 = vsyncpa [#allocation6], 0
    // Predicated region
    $region2: #{tpu_custom_call.1} parent=1 // pred_check
      _
    $region3: #{tpu_custom_call.1} parent=1 // pred_check_branch
      %17 = sbr.rel (0) target = $region5
    $region4: #{tpu_custom_call.1} parent=1 // pred_region
      %s19 = ssub.s32 256, 256
      %20 = vsyncadd [#allocation5], %s19
      %s21 = sshll.u32 [#allocation4], 4
      %s22 = int_to_ptr.vmem [resolvable:$true] %s21
      %27 = dma.hbm_to_vmem [thread:$0]  %s1, 256, %s22, [#allocation5], 128, 128, 8
    $region5: #{tpu_custom_call.1} parent=1 // pred_fallthru
      _
    // Predicated region
    $region6: #{tpu_custom_call.1} parent=1 // pred_check
      _
    $region7: #{tpu_custom_call.1} parent=1 // pred_check_branch
      %29 = sbr.rel (0) target = $region9
    $region8: #{tpu_custom_call.1} parent=1 // pred_region
      _
    $region9: #{tpu_custom_call.1} parent=1 // pred_fallthru
      _
    // Predicated region
    $region10: #{tpu_custom_call.1} parent=1 // pred_check
      _
    $region11: #{tpu_custom_call.1} parent=1 // pred_check_branch
      %31 = sbr.rel (0) target = $region13
    $region12: #{tpu_custom_call.1} parent=1 // pred_region
      %s33 = ssub.s32 512, 512
      %34 = vsyncadd [#allocation8], %s33
      %s35 = sshll.u32 [#allocation7], 4
      %s36 = int_to_ptr.vmem [resolvable:$true] %s35
      %41 = dma.hbm_to_vmem [thread:$0]  %s3, 512, %s36, [#allocation8], 128, 128, 8
    $region13: #{tpu_custom_call.1} parent=1 // pred_fallthru
      _
    // Predicated region
    $region14: #{tpu_custom_call.1} parent=1 // pred_check
      _
    $region15: #{tpu_custom_call.1} parent=1 // pred_check_branch
      %43 = sbr.rel (0) target = $region17
    $region16: #{tpu_custom_call.1} parent=1 // pred_region
      %s45 = ssub.s32 512, 512
      %46 = vsyncadd [#allocation8], %s45
      %s47 = sshll.u32 [#allocation9], 4
      %s48 = int_to_ptr.vmem [resolvable:$true] %s47
      %53 = dma.hbm_to_vmem [thread:$0]  %s4, 512, %s48, [#allocation8], 128, 128, 8
    $region17: #{tpu_custom_call.1} parent=1 // pred_fallthru
      _
    // Predicated region
    $region18: #{tpu_custom_call.1} parent=1 // pred_check
      _
    $region19: #{tpu_custom_call.1} parent=1 // pred_check_branch
      %55 = sbr.rel (0) target = $region21
    $region20: #{tpu_custom_call.1} parent=1 // pred_region
      _
    $region21: #{tpu_custom_call.1} parent=1 // pred_fallthru
      _
    // Predicated region
    $region22: #{tpu_custom_call.1} parent=1 // pred_check
      _
    $region23: #{tpu_custom_call.1} parent=1 // pred_check_branch
      %57 = sbr.rel (0) target = $region25
    $region24: #{tpu_custom_call.1} parent=1 // pred_region
      _
    $region25: #{tpu_custom_call.1} parent=1 // pred_fallthru
      _
    // Predicated region
    $region26: #{tpu_custom_call.1} parent=1 // pred_check
      _
    $region27: #{tpu_custom_call.1} parent=1 // pred_check_branch
      %59 = sbr.rel (0) target = $region29
    $region28: #{tpu_custom_call.1} parent=1 // pred_region
      %60 = dma.done [#allocation5], 256
    $region29: #{tpu_custom_call.1} parent=1 // pred_fallthru
      _
    // Predicated region
    $region30: #{tpu_custom_call.1} parent=1 // pred_check
      _
    $region31: #{tpu_custom_call.1} parent=1 // pred_check_branch
      %62 = sbr.rel (0) target = $region33
    $region32: #{tpu_custom_call.1} parent=1 // pred_region
      %63 = dma.done [#allocation8], 512
    $region33: #{tpu_custom_call.1} parent=1 // pred_fallthru
      _
    // Predicated region
    $region34: #{tpu_custom_call.1} parent=1 // pred_check
      _
    $region35: #{tpu_custom_call.1} parent=1 // pred_check_branch
      %65 = sbr.rel (0) target = $region37
    $region36: #{tpu_custom_call.1} parent=1 // pred_region
      %66 = dma.done [#allocation8], 512
    $region37: #{tpu_custom_call.1} parent=1 // pred_fallthru
      _
    %v67 = vld [vmem:[#allocation7] sm:$0xff]
    %v68 = vld [vmem:[#allocation7 + $0x8] sm:$0xff]
    %v69 = vld [vmem:[#allocation7 + $0x10] sm:$0xff]
    %v70 = vld [vmem:[#allocation7 + $0x18] sm:$0xff]
    %v71 = vld [vmem:[#allocation9] sm:$0xff]
    %v72 = vld [vmem:[#allocation9 + $0x8] sm:$0xff]
    %v73 = vld [vmem:[#allocation9 + $0x10] sm:$0xff]
    %v74 = vld [vmem:[#allocation9 + $0x18] sm:$0xff]
    %v75 = vld [vmem:[%s5] sm:$0x1]
    %v76 = vld [vmem:[%s6] sm:$0x1]
    %v77 = vld [vmem:[%s2] sm:$0x1]
    %s78 = sld [smem:[#allocation3]]
    %s79 = scalar_lea.vmem [#allocation4], %s78
    %v80 = vld [vmem:[%s79] sm:$0x1]
    %vm81 = vcmask 261120
    %v83 = vsel %vm81, %v80, 0
    %85 = vmatprep.subr.mxu0 0.0
    %86 = vmatpush1.msra.mxu0 %v67
    %87 = vmatprep.subr.mxu0 0.0
    %88 = vmatpush1.msra.mxu0 %v68
    %89 = vmatprep.subr.mxu0 0.0
    %90 = vmatpush1.msra.mxu0 %v69
    %91 = vmatprep.subr.mxu0 0.0
    %92 = vmatpush1.msra.mxu0 %v70
    %93 = vmatprep.subr.mxu0 0.0
    %94 = vmatpush1.msra.mxu0 0.0
    %95 = vmatprep.subr.mxu0 0.0
    %96 = vmatpush1.msra.mxu0 0.0
    %97 = vmatprep.subr.mxu0 0.0
    %98 = vmatpush1.msra.mxu0 0.0
    %99 = vmatprep.subr.mxu0 0.0
    %100 = vmatpush1.msra.mxu0 0.0
    %101 = vmatprep.subr.mxu0 0.0
    %102 = vmatpush1.msra.mxu0 0.0
    %103 = vmatprep.subr.mxu0 0.0
    %104 = vmatpush1.msra.mxu0 0.0
    %105 = vmatprep.subr.mxu0 0.0
    %106 = vmatpush1.msra.mxu0 0.0
    %107 = vmatprep.subr.mxu0 0.0
    %108 = vmatpush1.msra.mxu0 0.0
    %109 = vmatprep.subr.mxu0 0.0
    %110 = vmatpush1.msra.mxu0 0.0
    %111 = vmatprep.subr.mxu0 0.0
    %112 = vmatpush1.msra.mxu0 0.0
    %113 = vmatprep.subr.mxu0 0.0
    %114 = vmatpush1.msra.mxu0 0.0
    %115 = vmatprep.subr.mxu0 0.0
    %116 = vmatpush1.msra.mxu0 0.0
    %117 = vmatprep.subr.mxu0 0.0
    %118 = vmatpush1.msra.mxu0 0.0
    %119 = vmatprep.subr.mxu0 0.0
    %120 = vmatpush1.msra.mxu0 0.0
    %121 = vmatprep.subr.mxu0 0.0
    %122 = vmatpush1.msra.mxu0 0.0
    %123 = vmatprep.subr.mxu0 0.0
    %124 = vmatpush1.msra.mxu0 0.0
    %125 = vmatprep.subr.mxu0 0.0
    %126 = vmatpush1.msra.mxu0 0.0
    %127 = vmatprep.subr.mxu0 0.0
    %128 = vmatpush1.msra.mxu0 0.0
    %129 = vmatprep.subr.mxu0 0.0
    %130 = vmatpush1.msra.mxu0 0.0
    %131 = vmatprep.subr.mxu0 0.0
    %132 = vmatpush1.msra.mxu0 0.0
    %133 = vmatprep.subr.mxu0 0.0
    %134 = vmatpush1.msra.mxu0 0.0
    %135 = vmatprep.subr.mxu0 0.0
    %136 = vmatpush1.msra.mxu0 0.0
    %137 = vmatprep.subr.mxu0 0.0
    %138 = vmatpush1.msra.mxu0 0.0
    %139 = vmatprep.subr.mxu0 0.0
    %140 = vmatpush1.msra.mxu0 0.0
    %141 = vmatprep.subr.mxu0 0.0
    %142 = vmatpush1.msra.mxu0 0.0
    %143 = vmatprep.subr.mxu0 0.0
    %144 = vmatpush1.msra.mxu0 0.0
    %145 = vmatprep.subr.mxu0 0.0
    %146 = vmatpush1.msra.mxu0 0.0
    %147 = vmatprep.subr.mxu0 0.0
    %148 = vmatpush1.msra.mxu0 0.0
    %149 = vmatprep.mubr.f32.mxu0 0.0
    %150 = vmatmul.mubr.f32.gmra.mrb[0].mxu0 %v83
    %v151 = vpop.f32.mrb[0].mxu0
    %v152 = vadd.f32 %v75, %v151
    %v153 = vpop.f32.mrb[0].mxu0
    %154 = vdwg.mxu0
    %v156 = vsel %vm81, %v77, 0
    %158 = vmatprep.subr.mxu0 0.0
    %159 = vmatpush1.msra.mxu0 %v71
    %160 = vmatprep.subr.mxu0 0.0
    %161 = vmatpush1.msra.mxu0 %v72
    %162 = vmatprep.subr.mxu0 0.0
    %163 = vmatpush1.msra.mxu0 %v73
    %164 = vmatprep.subr.mxu0 0.0
    %165 = vmatpush1.msra.mxu0 %v74
    %166 = vmatprep.subr.mxu0 0.0
    %167 = vmatpush1.msra.mxu0 0.0
    %168 = vmatprep.subr.mxu0 0.0
    %169 = vmatpush1.msra.mxu0 0.0
    %170 = vmatprep.subr.mxu0 0.0
    %171 = vmatpush1.msra.mxu0 0.0
    %172 = vmatprep.subr.mxu0 0.0
    %173 = vmatpush1.msra.mxu0 0.0
    %174 = vmatprep.subr.mxu0 0.0
    %175 = vmatpush1.msra.mxu0 0.0
    %176 = vmatprep.subr.mxu0 0.0
    %177 = vmatpush1.msra.mxu0 0.0
    %178 = vmatprep.subr.mxu0 0.0
    %179 = vmatpush1.msra.mxu0 0.0
    %180 = vmatprep.subr.mxu0 0.0
    %181 = vmatpush1.msra.mxu0 0.0
    %182 = vmatprep.subr.mxu0 0.0
    %183 = vmatpush1.msra.mxu0 0.0
    %184 = vmatprep.subr.mxu0 0.0
    %185 = vmatpush1.msra.mxu0 0.0
    %186 = vmatprep.subr.mxu0 0.0
    %187 = vmatpush1.msra.mxu0 0.0
    %188 = vmatprep.subr.mxu0 0.0
    %189 = vmatpush1.msra.mxu0 0.0
    %190 = vmatprep.subr.mxu0 0.0
    %191 = vmatpush1.msra.mxu0 0.0
    %192 = vmatprep.subr.mxu0 0.0
    %193 = vmatpush1.msra.mxu0 0.0
    %194 = vmatprep.subr.mxu0 0.0
    %195 = vmatpush1.msra.mxu0 0.0
    %196 = vmatprep.subr.mxu0 0.0
    %197 = vmatpush1.msra.mxu0 0.0
    %198 = vmatprep.subr.mxu0 0.0
    %199 = vmatpush1.msra.mxu0 0.0
    %200 = vmatprep.subr.mxu0 0.0
    %201 = vmatpush1.msra.mxu0 0.0
    %202 = vmatprep.subr.mxu0 0.0
    %203 = vmatpush1.msra.mxu0 0.0
    %204 = vmatprep.subr.mxu0 0.0
    %205 = vmatpush1.msra.mxu0 0.0
    %206 = vmatprep.subr.mxu0 0.0
    %207 = vmatpush1.msra.mxu0 0.0
    %208 = vmatprep.subr.mxu0 0.0
    %209 = vmatpush1.msra.mxu0 0.0
    %210 = vmatprep.subr.mxu0 0.0
    %211 = vmatpush1.msra.mxu0 0.0
    %212 = vmatprep.subr.mxu0 0.0
    %213 = vmatpush1.msra.mxu0 0.0
    %214 = vmatprep.subr.mxu0 0.0
    %215 = vmatpush1.msra.mxu0 0.0
    %216 = vmatprep.subr.mxu0 0.0
    %217 = vmatpush1.msra.mxu0 0.0
    %218 = vmatprep.subr.mxu0 0.0
    %219 = vmatpush1.msra.mxu0 0.0
    %220 = vmatprep.subr.mxu0 0.0
    %221 = vmatpush1.msra.mxu0 0.0
    %222 = vmatprep.mubr.f32.mxu0 0.0
    %223 = vmatmul.mubr.f32.gmra.mrb[0].mxu0 %v156
    %v224 = vpop.f32.mrb[0].mxu0
    %v225 = vadd.f32 %v76, %v224
    %v226 = vpop.f32.mrb[0].mxu0
    %227 = vdwg.mxu0
    %v228 = vadd.f32 %v152, %v225
    %v229 = vxor.u32 %v228, 2147483648
    %v230 = vmul.f32 %v229, 1.442695
    %v231 = vpow.pop %v230
    %v232 = vadd.f32 %v231, 1.0
    %v233 = vrcp.pop %v232
    %v234 = vmul.f32 1.0, %v233
    %236 = vrot.lane.b32.xlu0 %v225, 64
    %v237 = vpop.permute.xlu0 %236
    %v239 = vmul.f32 %v234, %v237
    %241 = vrot.lane.b32.xlu0 %v239, 64
    %v242 = vpop.permute.xlu0 %241
    %v244 = vadd.f32 %v152, %v242
    %v245 = vtanh.pop %v244
    %v246 = vsub.f32 1.0, %v234
    %248 = vrot.lane.b32.xlu0 %v245, 96
    %v249 = vpop.permute.xlu0 %248
    %v251 = vmul.f32 %v246, %v249
    %v252 = vlaneseq
    %v253 = vshrl.u32 %v252, 7
    %v254 = vsub.s32 0, %v253
    %v255 = vrot.slane %v77, %v254
    %256 = vrot.lane.b32.xlu0 %v255, 32
    %v257 = vpop.permute.xlu0 %256
    %v259 = vmul.f32 %v234, %v257
    %v260 = vadd.f32 %v251, %v259
    %262 = vrot.lane.b32.xlu0 %v260, 96
    %v263 = vpop.permute.xlu0 %262
    %vm265 = vcmask 253952
    %266 = vst.msk [vmem:[#allocation10] sm:$0x1] %vm265, %v263
    // Predicated region
    $region38: #{tpu_custom_call.1} parent=1 // pred_check
      _
    $region39: #{tpu_custom_call.1} parent=1 // pred_check_branch
      %268 = sbr.rel (0) target = $region41
    $region40: #{tpu_custom_call.1} parent=1 // pred_region
      %s270 = ssub.s32 16, 16
      %271 = vsyncadd [#allocation6], %s270
      %s273 = sshll.u32 [#allocation10], 4
      %s274 = int_to_ptr.vmem [resolvable:$true] %s273
      %276 = dma.vmem_to_hbm [thread:$0]  %s274, 16, %s7, [#allocation6]
    $region41: #{tpu_custom_call.1} parent=1 // pred_fallthru
      _
    // Predicated region
    $region42: #{tpu_custom_call.1} parent=1 // pred_check
      _
    $region43: #{tpu_custom_call.1} parent=1 // pred_check_branch
      %278 = sbr.rel (0) target = $region45
    $region44: #{tpu_custom_call.1} parent=1 // pred_region
      %279 = dma.done [#allocation6], 16
    $region45: #{tpu_custom_call.1} parent=1 // pred_fallthru
      _
    %280 = vsyncpa [#allocation5], 1
    %281 = vsyncpa [#allocation8], 1
    %282 = vsyncpa [#allocation6], 1

</llo_original>
